<compile_context>
chip_gen: v7x
topology: tpu7x:2x2x1
jax: 0.10.0
libtpu: 0.0.40
codegen_flags: <defaults>
</compile_context>

<pallas_src>
import functools

import jax
import jax.numpy as jnp
from jax.experimental import pallas as pl
from jax.experimental.pallas import tpu as pltpu

LANE = 128      # lane width (last dim alignment)
SUBLANE = 8     # f32 sublane height (second-to-last dim alignment)


def _round_up(x, m):
    return (x + m - 1) // m * m


# ---------------------------------------------------------------------------
# Fused kernel: x -> [Linear + Tanh] * (L-1) -> Linear -> Softmax
# ---------------------------------------------------------------------------
def make_fused_mlp_kernel(num_layers, num_classes):
    """Builds a kernel taking (x_ref, w1, b1, ..., wL, bL, o_ref)."""

    def kernel(*refs):
        x_ref = refs[0]
        o_ref = refs[-1]
        h = x_ref[...]                      # (tile_n, in_pad), compute dtype
        for i in range(num_layers):
            w_ref = refs[1 + 2 * i]         # (in_pad_i, out_pad_i)
            b_ref = refs[2 + 2 * i]         # (1, out_pad_i), f32
            # MXU matmul with f32 accumulation; bias add on the f32 accumulator.
            y = jnp.dot(h, w_ref[...], preferred_element_type=jnp.float32)
            y = y + b_ref[...]
            if i < num_layers - 1:
                # Padded out-lanes are exactly 0 (zero weight cols + zero bias),
                # tanh(0) = 0, so they stay inert for the next matmul.
                h = jnp.tanh(y).astype(w_ref.dtype)
            else:
                # Softmax over the real classes only: mask padded logit lanes.
                col = jax.lax.broadcasted_iota(jnp.int32, y.shape, 1)
                y = jnp.where(col < num_classes, y, jnp.float32(-1e30))
                m = jnp.max(y, axis=1, keepdims=True)
                e = jnp.exp(y - m)
                denom = jnp.sum(e, axis=1, keepdims=True)
                o_ref[...] = e * pl.reciprocal(denom, approx=False)

    return kernel


# ---------------------------------------------------------------------------
# Parameter setup (done once, outside the jitted forward)
# ---------------------------------------------------------------------------
def init_linear_net_params(key, in_features, hidden_size, num_classes):
    """PyTorch nn.Linear-style init: U(-1/sqrt(fan_in), 1/sqrt(fan_in)).

    Note: the module's `setup_dfa` zero-fills weights/biases for train_mode='dfa';
    we keep deterministic random weights so the kernel output is meaningful —
    the forward-pass semantics are identical either way.
    """
    sizes = [in_features] + list(hidden_size) + [num_classes]
    params = []
    for i in range(len(sizes) - 1):
        fan_in, fan_out = sizes[i], sizes[i + 1]
        key, kw, kb = jax.random.split(key, 3)
        bound = 1.0 / jnp.sqrt(jnp.float32(fan_in))
        w = jax.random.uniform(kw, (fan_out, fan_in), jnp.float32, -bound, bound)
        b = jax.random.uniform(kb, (fan_out,), jnp.float32, -bound, bound)
        params.append((w, b))
    return params


def prepare_params(params, in_features, compute_dtype=jnp.float32):
    """Pre-transpose to (in, out), zero-pad feature dims to 128 lanes, cast weights.

    Biases stay f32 (added on the f32 accumulator inside the kernel).
    """
    sizes = [in_features] + [w.shape[0] for (w, _) in params]
    padded = [_round_up(s, LANE) for s in sizes]
    ws_t, bs = [], []
    for i, (w, b) in enumerate(params):
        fan_in, fan_out = sizes[i], sizes[i + 1]
        in_p, out_p = padded[i], padded[i + 1]
        w_t = jnp.zeros((in_p, out_p), compute_dtype)
        w_t = w_t.at[:fan_in, :fan_out].set(jnp.transpose(w).astype(compute_dtype))
        b_row = jnp.zeros((1, out_p), jnp.float32)
        b_row = b_row.at[:, :fan_out].set(b.astype(jnp.float32))
        ws_t.append(w_t)
        bs.append(b_row)
    return ws_t, bs


# ---------------------------------------------------------------------------
# Fused forward pass (single pallas_call)
# ---------------------------------------------------------------------------
@functools.partial(jax.jit, static_argnames=("in_features", "num_classes", "tile_n"))
def linear_net_forward(x, ws_t, bs, *, in_features, num_classes, tile_n=512):
    num_layers = len(ws_t)
    compute_dtype = ws_t[0].dtype
    in_pad = ws_t[0].shape[0]
    out_pad = ws_t[-1].shape[1]

    # x.view(-1, in_features), then zero-pad to lane/sublane-aligned slab.
    h = x.reshape(-1, in_features)
    n = h.shape[0]
    tile = min(tile_n, _round_up(n, SUBLANE))      # batch tile (multiple of 8)
    n_pad = _round_up(n, tile)
    x_p = jnp.zeros((n_pad, in_pad), compute_dtype)
    x_p = x_p.at[:n, :in_features].set(h.astype(compute_dtype))

    row_map = lambda i: (i, 0)       # tiled over the batch axis
    const_map = lambda i: (0, 0)     # grid-invariant (weights stay resident)

    in_specs = [pl.BlockSpec((tile, in_pad), row_map)]
    operands = [x_p]
    for w_t, b_row in zip(ws_t, bs):
        in_specs.append(pl.BlockSpec(w_t.shape, const_map))
        in_specs.append(pl.BlockSpec(b_row.shape, const_map))
        operands += [w_t, b_row]

    out = pl.pallas_call(
        make_fused_mlp_kernel(num_layers, num_classes),
        out_shape=jax.ShapeDtypeStruct((n_pad, out_pad), jnp.float32),
        grid=(n_pad // tile,),
        in_specs=in_specs,
        out_specs=pl.BlockSpec((tile, out_pad), row_map),
        compiler_params=pltpu.CompilerParams(
            # Batch tiles are independent -> shard across v7x's 2 TensorCores.
            dimension_semantics=("parallel",),
        ),
    )(*operands)

    # Slice the real batch rows / classes out of the lane-dense padded output.
    return out[:n, :num_classes]


# ---------------------------------------------------------------------------
# Pure-JAX reference for a sanity check
# ---------------------------------------------------------------------------
def linear_net_reference(x, params, in_features):
    h = x.reshape(-1, in_features).astype(jnp.float32)
    n_layers = len(params)
    for i, (w, b) in enumerate(params):
        h = h @ w.T + b
        if i == n_layers - 1:
            h = jax.nn.softmax(h, axis=1)
        else:
            h = jnp.tanh(h)
    return h


if __name__ == "__main__":
    # Small, module-consistent config:
    #   net_parameters = dict(in_features=32, num_hidden_layer=2,
    #                         hidden_size=[64, 48], num_classes=10, batch_size=4)
    in_features = 32
    hidden_size = [64, 48]
    num_classes = 10
    batch_size = 4

    key = jax.random.PRNGKey(0)
    key, kx = jax.random.split(key)
    # Input given as (N, 1, 4, 8) to exercise the view(-1, in_features) flatten.
    x = jax.random.normal(kx, (batch_size, 1, 4, 8), dtype=jnp.float32)

    params = init_linear_net_params(key, in_features, hidden_size, num_classes)

    # --- f32 path (exact parity with the reference) ---
    ws_t, bs = prepare_params(params, in_features, compute_dtype=jnp.float32)
    y_hat = linear_net_forward(x, ws_t, bs, in_features=in_features,
                               num_classes=num_classes)
    y_hat = jax.block_until_ready(y_hat)

    y_ref = linear_net_reference(x, params, in_features)
    assert y_hat.shape == (batch_size, num_classes)
    assert jnp.allclose(jnp.sum(y_hat, axis=1), 1.0, atol=1e-5)
    assert jnp.allclose(y_hat, y_ref, atol=1e-5, rtol=1e-5)

    # --- bf16 MXU-feed path (perf option on v6e/v7x; f32 accumulate/epilogue) ---
    ws_bf16, bs_bf16 = prepare_params(params, in_features, compute_dtype=jnp.bfloat16)
    y_bf16 = linear_net_forward(x, ws_bf16, bs_bf16, in_features=in_features,
                                num_classes=num_classes)
    y_bf16 = jax.block_until_ready(y_bf16)
    assert y_bf16.shape == (batch_size, num_classes)
    assert jnp.allclose(jnp.sum(y_bf16, axis=1), 1.0, atol=1e-4)
    assert jnp.allclose(y_bf16, y_ref, atol=1e-1)   # loose: bf16 inputs

    # TODO(synk): dfa_backward / backprop_backward / parameter_update are training-only
    # and not part of the forward pass; they are intentionally not implemented here.

    print("KERNEL_OK")
</pallas_src>

<mosaic_0001>
module attributes {stable_mosaic.version = 11 : i64} {
  func.func @kernel(%arg0: i32, %arg1: memref<8x128xf32, #tpu.memory_space<vmem>>, %arg2: memref<128x128xf32, #tpu.memory_space<vmem>>, %arg3: memref<1x128xf32, #tpu.memory_space<vmem>>, %arg4: memref<128x128xf32, #tpu.memory_space<vmem>>, %arg5: memref<1x128xf32, #tpu.memory_space<vmem>>, %arg6: memref<128x128xf32, #tpu.memory_space<vmem>>, %arg7: memref<1x128xf32, #tpu.memory_space<vmem>>, %arg8: memref<8x128xf32, #tpu.memory_space<vmem>>) attributes {dimension_semantics = [#tpu.dimension_semantics<parallel>], iteration_bounds = array<i64: 1>, scalar_prefetch = 0 : i64, scratch_operands = 0 : i64, tpu.core_type = #tpu.core_type<tc>, window_params = [{transform_indices = @transform_0, window_bounds = array<i64: 8, 128>}, {pipeline_mode = #tpu.pipeline_mode<synchronous>, transform_indices = @transform_1, window_bounds = array<i64: 128, 128>}, {pipeline_mode = #tpu.pipeline_mode<synchronous>, transform_indices = @transform_2, window_bounds = array<i64: 1, 128>}, {pipeline_mode = #tpu.pipeline_mode<synchronous>, transform_indices = @transform_3, window_bounds = array<i64: 128, 128>}, {pipeline_mode = #tpu.pipeline_mode<synchronous>, transform_indices = @transform_4, window_bounds = array<i64: 1, 128>}, {pipeline_mode = #tpu.pipeline_mode<synchronous>, transform_indices = @transform_5, window_bounds = array<i64: 128, 128>}, {pipeline_mode = #tpu.pipeline_mode<synchronous>, transform_indices = @transform_6, window_bounds = array<i64: 1, 128>}, {transform_indices = @transform_7, window_bounds = array<i64: 8, 128>}]} {
    %c0 = arith.constant 0 : index
    %c0_0 = arith.constant 0 : index
    %0 = vector.load %arg1[%c0, %c0_0] : memref<8x128xf32, #tpu.memory_space<vmem>>, vector<8x128xf32>
    %c0_1 = arith.constant 0 : index
    %c0_2 = arith.constant 0 : index
    %1 = vector.load %arg2[%c0_1, %c0_2] : memref<128x128xf32, #tpu.memory_space<vmem>>, vector<128x128xf32>
    %cst = arith.constant dense<0.000000e+00> : vector<8x128xf32>
    %2 = tpu.matmul %0, %1, %cst {dimension_numbers = #tpu.dot_dimension_numbers<[1], [0], [0], [1], [0, 0, 1, 1], [], []>} : vector<8x128xf32>, vector<128x128xf32>, vector<8x128xf32> -> vector<8x128xf32>
    %c0_3 = arith.constant 0 : index
    %c0_4 = arith.constant 0 : index
    %3 = vector.load %arg3[%c0_3, %c0_4] : memref<1x128xf32, #tpu.memory_space<vmem>>, vector<1x128xf32>
    %4 = vector.broadcast %3 : vector<1x128xf32> to vector<8x128xf32>
    %5 = arith.addf %2, %4 : vector<8x128xf32>
    %6 = math.tanh %5 : vector<8x128xf32>
    %c0_5 = arith.constant 0 : index
    %c0_6 = arith.constant 0 : index
    %7 = vector.load %arg4[%c0_5, %c0_6] : memref<128x128xf32, #tpu.memory_space<vmem>>, vector<128x128xf32>
    %cst_7 = arith.constant dense<0.000000e+00> : vector<8x128xf32>
    %8 = tpu.matmul %6, %7, %cst_7 {dimension_numbers = #tpu.dot_dimension_numbers<[1], [0], [0], [1], [0, 0, 1, 1], [], []>} : vector<8x128xf32>, vector<128x128xf32>, vector<8x128xf32> -> vector<8x128xf32>
    %c0_8 = arith.constant 0 : index
    %c0_9 = arith.constant 0 : index
    %9 = vector.load %arg5[%c0_8, %c0_9] : memref<1x128xf32, #tpu.memory_space<vmem>>, vector<1x128xf32>
    %10 = vector.broadcast %9 : vector<1x128xf32> to vector<8x128xf32>
    %11 = arith.addf %8, %10 : vector<8x128xf32>
    %12 = math.tanh %11 : vector<8x128xf32>
    %c0_10 = arith.constant 0 : index
    %c0_11 = arith.constant 0 : index
    %13 = vector.load %arg6[%c0_10, %c0_11] : memref<128x128xf32, #tpu.memory_space<vmem>>, vector<128x128xf32>
    %cst_12 = arith.constant dense<0.000000e+00> : vector<8x128xf32>
    %14 = tpu.matmul %12, %13, %cst_12 {dimension_numbers = #tpu.dot_dimension_numbers<[1], [0], [0], [1], [0, 0, 1, 1], [], []>} : vector<8x128xf32>, vector<128x128xf32>, vector<8x128xf32> -> vector<8x128xf32>
    %c0_13 = arith.constant 0 : index
    %c0_14 = arith.constant 0 : index
    %15 = vector.load %arg7[%c0_13, %c0_14] : memref<1x128xf32, #tpu.memory_space<vmem>>, vector<1x128xf32>
    %16 = vector.broadcast %15 : vector<1x128xf32> to vector<8x128xf32>
    %17 = arith.addf %14, %16 : vector<8x128xf32>
    %18 = tpu.iota {dimensions = array<i32: 1>} : vector<8x128xi32>
    %c10_i32 = arith.constant 10 : i32
    %19 = vector.broadcast %c10_i32 : i32 to vector<8x128xi32>
    %20 = arith.cmpi slt, %18, %19 : vector<8x128xi32>
    %cst_15 = arith.constant -1.000000e+30 : f32
    %21 = vector.broadcast %cst_15 : f32 to vector<8x128xf32>
    %22 = arith.select %20, %17, %21 : vector<8x128xi1>, vector<8x128xf32>
    %cst_16 = arith.constant dense<0xFF800000> : vector<8xf32>
    %23 = vector.multi_reduction <maximumf>, %22, %cst_16 [1] : vector<8x128xf32> to vector<8xf32>
    %24 = vector.shape_cast %23 : vector<8xf32> to vector<8x1xf32>
    %25 = vector.broadcast %24 : vector<8x1xf32> to vector<8x128xf32>
    %26 = arith.subf %22, %25 : vector<8x128xf32>
    %27 = math.exp %26 : vector<8x128xf32>
    %cst_17 = arith.constant dense<0.000000e+00> : vector<8xf32>
    %28 = vector.multi_reduction <add>, %27, %cst_17 [1] : vector<8x128xf32> to vector<8xf32>
    %29 = vector.shape_cast %28 : vector<8xf32> to vector<8x1xf32>
    %30 = tpu.reciprocal %29 : vector<8x1xf32> -> vector<8x1xf32>
    %31 = vector.broadcast %30 : vector<8x1xf32> to vector<8x128xf32>
    %32 = arith.mulf %27, %31 : vector<8x128xf32>
    %c0_18 = arith.constant 0 : index
    %c0_19 = arith.constant 0 : index
    %33 = vector.load %arg8[%c0_18, %c0_19] : memref<8x128xf32, #tpu.memory_space<vmem>>, vector<8x128xf32>
    tpu.vector_store %arg8[%c0_18, %c0_19], %32 {strides = array<i32>} : memref<8x128xf32, #tpu.memory_space<vmem>>, vector<8x128xf32>,
    return
  }
  func.func @transform_0(%arg0: i32) -> (i32, i32) {
    %c0_i32 = arith.constant 0 : i32
    %c0_i32_0 = arith.constant 0 : i32
    return %arg0, %c0_i32 : i32, i32
  }
  func.func @transform_1(%arg0: i32) -> (i32, i32) {
    %c0_i32 = arith.constant 0 : i32
    %c0_i32_0 = arith.constant 0 : i32
    %c0_i32_1 = arith.constant 0 : i32
    return %c0_i32, %c0_i32_0 : i32, i32
  }
  func.func @transform_2(%arg0: i32) -> (i32, i32) {
    %c0_i32 = arith.constant 0 : i32
    %c0_i32_0 = arith.constant 0 : i32
    %c0_i32_1 = arith.constant 0 : i32
    return %c0_i32, %c0_i32_0 : i32, i32
  }
  func.func @transform_3(%arg0: i32) -> (i32, i32) {
    %c0_i32 = arith.constant 0 : i32
    %c0_i32_0 = arith.constant 0 : i32
    %c0_i32_1 = arith.constant 0 : i32
    return %c0_i32, %c0_i32_0 : i32, i32
  }
  func.func @transform_4(%arg0: i32) -> (i32, i32) {
    %c0_i32 = arith.constant 0 : i32
    %c0_i32_0 = arith.constant 0 : i32
    %c0_i32_1 = arith.constant 0 : i32
    return %c0_i32, %c0_i32_0 : i32, i32
  }
  func.func @transform_5(%arg0: i32) -> (i32, i32) {
    %c0_i32 = arith.constant 0 : i32
    %c0_i32_0 = arith.constant 0 : i32
    %c0_i32_1 = arith.constant 0 : i32
    return %c0_i32, %c0_i32_0 : i32, i32
  }
  func.func @transform_6(%arg0: i32) -> (i32, i32) {
    %c0_i32 = arith.constant 0 : i32
    %c0_i32_0 = arith.constant 0 : i32
    %c0_i32_1 = arith.constant 0 : i32
    return %c0_i32, %c0_i32_0 : i32, i32
  }
  func.func @transform_7(%arg0: i32) -> (i32, i32) {
    %c0_i32 = arith.constant 0 : i32
    %c0_i32_0 = arith.constant 0 : i32
    return %arg0, %c0_i32 : i32, i32
  }
}

</mosaic_0001>

<llo_original>
// kernel: linear_net_forward.1
$region0: #{linear_net_forward.1}
  #allocation0 [shape = 'u32[]', space=smem, size = 0x4, offset = 0x4, fixed_abs, tag = 'smem constant byte address 0x4 - core index']
  #allocation1 [shape = 'u32[144,128]{1,0:T(1,128)}', space=vmem, size = 0x12000, scoped, tag = 'internal scratch']
  %s0 = inlined_call_operand.vmem [shape: f32[8,128], index: 0, kind: input, shape index: {}]
  %s1 = inlined_call_operand.hbm [shape: f32[128,128], index: 1, kind: input, shape index: {}]
  %s2 = inlined_call_operand.vmem [shape: f32[1,128], index: 2, kind: input, shape index: {}]
  %s3 = inlined_call_operand.hbm [shape: f32[128,128], index: 3, kind: input, shape index: {}]
  %s4 = inlined_call_operand.vmem [shape: f32[1,128], index: 4, kind: input, shape index: {}]
  %s5 = inlined_call_operand.hbm [shape: f32[128,128], index: 5, kind: input, shape index: {}]
  %s6 = inlined_call_operand.vmem [shape: f32[1,128], index: 6, kind: input, shape index: {}]
  %s7 = inlined_call_operand.vmem [shape: f32[8,128], index: 7, kind: output, shape index: {}]
  %s8 = sld [smem:[#allocation0]]
  $region50: #{linear_net_forward.1} parent=0
    _
  %s10 = ssub.s32 1, %s8
  %s11 = scalar_select 0, %s10, %s8
  $region1: #{linear_net_forward.1} parent=0
    #allocation2 [shape = 'u8[65536]{0}', space=vmem, size = 0x10000, scoped, tag = 'input window, operand 1, single buffered']
    #allocation3 [shape = 's32[1]{0}', space=sflag, size = 0x4, scoped, tag = 'scoped memory for linear_net_forward.1']
    #allocation4 [shape = 'u8[65536]{0}', space=vmem, size = 0x10000, scoped, tag = 'input window, operand 3, single buffered']
    #allocation5 [shape = 's32[1]{0}', space=sflag, size = 0x4, scoped, tag = 'scoped memory for linear_net_forward.1']
    #allocation6 [shape = 'u8[65536]{0}', space=vmem, size = 0x10000, scoped, tag = 'input window, operand 5, single buffered']
    %12 = vsyncpa [#allocation3], 0
    %13 = vsyncpa [#allocation5], 0
    // Predicated region
    $region2: #{linear_net_forward.1} parent=1 // pred_check
      _
    $region3: #{linear_net_forward.1} parent=1 // pred_check_branch
      %15 = sbr.rel (0) target = $region5
    $region4: #{linear_net_forward.1} parent=1 // pred_region
      _
    $region5: #{linear_net_forward.1} parent=1 // pred_fallthru
      _
    // Predicated region
    $region6: #{linear_net_forward.1} parent=1 // pred_check
      _
    $region7: #{linear_net_forward.1} parent=1 // pred_check_branch
      %17 = sbr.rel (0) target = $region9
    $region8: #{linear_net_forward.1} parent=1 // pred_region
      %s19 = ssub.s32 2048, 2048
      %20 = vsyncadd [#allocation3], %s19
      %s21 = sshll.u32 [#allocation2], 4
      %s22 = int_to_ptr.vmem [resolvable:$true] %s21
      %27 = dma.hbm_to_vmem [thread:$0]  %s1, 2048, %s22, [#allocation3], 128, 128, 8
    $region9: #{linear_net_forward.1} parent=1 // pred_fallthru
      _
    // Predicated region
    $region10: #{linear_net_forward.1} parent=1 // pred_check
      _
    $region11: #{linear_net_forward.1} parent=1 // pred_check_branch
      %29 = sbr.rel (0) target = $region13
    $region12: #{linear_net_forward.1} parent=1 // pred_region
      _
    $region13: #{linear_net_forward.1} parent=1 // pred_fallthru
      _
    // Predicated region
    $region14: #{linear_net_forward.1} parent=1 // pred_check
      _
    $region15: #{linear_net_forward.1} parent=1 // pred_check_branch
      %31 = sbr.rel (0) target = $region17
    $region16: #{linear_net_forward.1} parent=1 // pred_region
      %s33 = ssub.s32 2048, 2048
      %34 = vsyncadd [#allocation5], %s33
      %s35 = sshll.u32 [#allocation4], 4
      %s36 = int_to_ptr.vmem [resolvable:$true] %s35
      %41 = dma.hbm_to_vmem [thread:$0]  %s3, 2048, %s36, [#allocation5], 128, 128, 8
    $region17: #{linear_net_forward.1} parent=1 // pred_fallthru
      _
    // Predicated region
    $region18: #{linear_net_forward.1} parent=1 // pred_check
      _
    $region19: #{linear_net_forward.1} parent=1 // pred_check_branch
      %43 = sbr.rel (0) target = $region21
    $region20: #{linear_net_forward.1} parent=1 // pred_region
      _
    $region21: #{linear_net_forward.1} parent=1 // pred_fallthru
      _
    // Predicated region
    $region22: #{linear_net_forward.1} parent=1 // pred_check
      _
    $region23: #{linear_net_forward.1} parent=1 // pred_check_branch
      %45 = sbr.rel (0) target = $region25
    $region24: #{linear_net_forward.1} parent=1 // pred_region
      %s47 = ssub.s32 2048, 2048
      %48 = vsyncadd [#allocation5], %s47
      %s49 = sshll.u32 [#allocation6], 4
      %s50 = int_to_ptr.vmem [resolvable:$true] %s49
      %55 = dma.hbm_to_vmem [thread:$0]  %s5, 2048, %s50, [#allocation5], 128, 128, 8
    $region25: #{linear_net_forward.1} parent=1 // pred_fallthru
      _
    // Predicated region
    $region26: #{linear_net_forward.1} parent=1 // pred_check
      _
    $region27: #{linear_net_forward.1} parent=1 // pred_check_branch
      %57 = sbr.rel (0) target = $region29
    $region28: #{linear_net_forward.1} parent=1 // pred_region
      _
    $region29: #{linear_net_forward.1} parent=1 // pred_fallthru
      _
    // Predicated region
    $region30: #{linear_net_forward.1} parent=1 // pred_check
      _
    $region31: #{linear_net_forward.1} parent=1 // pred_check_branch
      %59 = sbr.rel (0) target = $region33
    $region32: #{linear_net_forward.1} parent=1 // pred_region
      %60 = dma.done [#allocation3], 2048
    $region33: #{linear_net_forward.1} parent=1 // pred_fallthru
      _
    // Predicated region
    $region34: #{linear_net_forward.1} parent=1 // pred_check
      _
    $region35: #{linear_net_forward.1} parent=1 // pred_check_branch
      %62 = sbr.rel (0) target = $region37
    $region36: #{linear_net_forward.1} parent=1 // pred_region
      %63 = dma.done [#allocation5], 2048
    $region37: #{linear_net_forward.1} parent=1 // pred_fallthru
      _
    // Predicated region
    $region38: #{linear_net_forward.1} parent=1 // pred_check
      _
    $region39: #{linear_net_forward.1} parent=1 // pred_check_branch
      %65 = sbr.rel (0) target = $region41
    $region40: #{linear_net_forward.1} parent=1 // pred_region
      %66 = dma.done [#allocation5], 2048
    $region41: #{linear_net_forward.1} parent=1 // pred_fallthru
      _
    %v67 = vld [vmem:[%s0] sm:$0xff]
    %v68 = vld [vmem:[#allocation2] sm:$0xff]
    %v69 = vld [vmem:[#allocation2 + $0x8] sm:$0xff]
    %v70 = vld [vmem:[#allocation2 + $0x10] sm:$0xff]
    %v71 = vld [vmem:[#allocation2 + $0x18] sm:$0xff]
    %v72 = vld [vmem:[#allocation2 + $0x20] sm:$0xff]
    %v73 = vld [vmem:[#allocation2 + $0x28] sm:$0xff]
    %v74 = vld [vmem:[#allocation2 + $0x30] sm:$0xff]
    %v75 = vld [vmem:[#allocation2 + $0x38] sm:$0xff]
    %v76 = vld [vmem:[#allocation2 + $0x40] sm:$0xff]
    %v77 = vld [vmem:[#allocation2 + $0x48] sm:$0xff]
    %v78 = vld [vmem:[#allocation2 + $0x50] sm:$0xff]
    %v79 = vld [vmem:[#allocation2 + $0x58] sm:$0xff]
    %v80 = vld [vmem:[#allocation2 + $0x60] sm:$0xff]
    %v81 = vld [vmem:[#allocation2 + $0x68] sm:$0xff]
    %v82 = vld [vmem:[#allocation2 + $0x70] sm:$0xff]
    %v83 = vld [vmem:[#allocation2 + $0x78] sm:$0xff]
    %v84 = vld [vmem:[%s2] sm:$0x1]
    %v86 = vlaneseq
    %v87 = vshrl.u32 %v86, 7
    %v88 = vsub.s32 0, %v87
    %v89 = vrot.slane %v84, %v88
    %91 = vmatprep.subr.mxu0 0.0
    %92 = vmatpush1.msra.mxu0 %v68
    %93 = vmatprep.subr.mxu0 0.0
    %94 = vmatpush1.msra.mxu0 %v69
    %95 = vmatprep.subr.mxu0 0.0
    %96 = vmatpush1.msra.mxu0 %v70
    %97 = vmatprep.subr.mxu0 0.0
    %98 = vmatpush1.msra.mxu0 %v71
    %99 = vmatprep.subr.mxu0 0.0
    %100 = vmatpush1.msra.mxu0 %v72
    %101 = vmatprep.subr.mxu0 0.0
    %102 = vmatpush1.msra.mxu0 %v73
    %103 = vmatprep.subr.mxu0 0.0
    %104 = vmatpush1.msra.mxu0 %v74
    %105 = vmatprep.subr.mxu0 0.0
    %106 = vmatpush1.msra.mxu0 %v75
    %107 = vmatprep.subr.mxu0 0.0
    %108 = vmatpush1.msra.mxu0 %v76
    %109 = vmatprep.subr.mxu0 0.0
    %110 = vmatpush1.msra.mxu0 %v77
    %111 = vmatprep.subr.mxu0 0.0
    %112 = vmatpush1.msra.mxu0 %v78
    %113 = vmatprep.subr.mxu0 0.0
    %114 = vmatpush1.msra.mxu0 %v79
    %115 = vmatprep.subr.mxu0 0.0
    %116 = vmatpush1.msra.mxu0 %v80
    %117 = vmatprep.subr.mxu0 0.0
    %118 = vmatpush1.msra.mxu0 %v81
    %119 = vmatprep.subr.mxu0 0.0
    %120 = vmatpush1.msra.mxu0 %v82
    %121 = vmatprep.subr.mxu0 0.0
    %122 = vmatpush1.msra.mxu0 %v83
    %123 = vmatprep.subr.mxu0 0.0
    %124 = vmatpush1.msra.mxu0 0.0
    %125 = vmatprep.subr.mxu0 0.0
    %126 = vmatpush1.msra.mxu0 0.0
    %127 = vmatprep.subr.mxu0 0.0
    %128 = vmatpush1.msra.mxu0 0.0
    %129 = vmatprep.subr.mxu0 0.0
    %130 = vmatpush1.msra.mxu0 0.0
    %131 = vmatprep.subr.mxu0 0.0
    %132 = vmatpush1.msra.mxu0 0.0
    %133 = vmatprep.subr.mxu0 0.0
    %134 = vmatpush1.msra.mxu0 0.0
    %135 = vmatprep.subr.mxu0 0.0
    %136 = vmatpush1.msra.mxu0 0.0
    %137 = vmatprep.subr.mxu0 0.0
    %138 = vmatpush1.msra.mxu0 0.0
    %139 = vmatprep.subr.mxu0 0.0
    %140 = vmatpush1.msra.mxu0 0.0
    %141 = vmatprep.subr.mxu0 0.0
    %142 = vmatpush1.msra.mxu0 0.0
    %143 = vmatprep.subr.mxu0 0.0
    %144 = vmatpush1.msra.mxu0 0.0
    %145 = vmatprep.subr.mxu0 0.0
    %146 = vmatpush1.msra.mxu0 0.0
    %147 = vmatprep.subr.mxu0 0.0
    %148 = vmatpush1.msra.mxu0 0.0
    %149 = vmatprep.subr.mxu0 0.0
    %150 = vmatpush1.msra.mxu0 0.0
    %151 = vmatprep.subr.mxu0 0.0
    %152 = vmatpush1.msra.mxu0 0.0
    %153 = vmatprep.subr.mxu0 0.0
    %154 = vmatpush1.msra.mxu0 0.0
    %155 = vmatprep.mubr.f32.mxu0 0.0
    %156 = vmatmul.mubr.f32.gmra.mrb[0].mxu0 %v67
    %v157 = vpop.f32.mrb[0].mxu0
    %v158 = vadd.f32 %v89, %v157
    %v159 = vpop.f32.mrb[0].mxu0
    %160 = vdwg.mxu0
    %v161 = vtanh.pop %v158
    %v162 = vld [vmem:[#allocation4] sm:$0xff]
    %v163 = vld [vmem:[#allocation4 + $0x8] sm:$0xff]
    %v164 = vld [vmem:[#allocation4 + $0x10] sm:$0xff]
    %v165 = vld [vmem:[#allocation4 + $0x18] sm:$0xff]
    %v166 = vld [vmem:[#allocation4 + $0x20] sm:$0xff]
    %v167 = vld [vmem:[#allocation4 + $0x28] sm:$0xff]
    %v168 = vld [vmem:[#allocation4 + $0x30] sm:$0xff]
    %v169 = vld [vmem:[#allocation4 + $0x38] sm:$0xff]
    %v170 = vld [vmem:[#allocation4 + $0x40] sm:$0xff]
    %v171 = vld [vmem:[#allocation4 + $0x48] sm:$0xff]
    %v172 = vld [vmem:[#allocation4 + $0x50] sm:$0xff]
    %v173 = vld [vmem:[#allocation4 + $0x58] sm:$0xff]
    %v174 = vld [vmem:[#allocation4 + $0x60] sm:$0xff]
    %v175 = vld [vmem:[#allocation4 + $0x68] sm:$0xff]
    %v176 = vld [vmem:[#allocation4 + $0x70] sm:$0xff]
    %v177 = vld [vmem:[#allocation4 + $0x78] sm:$0xff]
    %v178 = vld [vmem:[%s4] sm:$0x1]
    %v180 = vlaneseq
    %v181 = vshrl.u32 %v180, 7
    %v182 = vsub.s32 0, %v181
    %v183 = vrot.slane %v178, %v182
    %185 = vmatprep.subr.mxu0 0.0
    %186 = vmatpush1.msra.mxu0 %v162
    %187 = vmatprep.subr.mxu0 0.0
    %188 = vmatpush1.msra.mxu0 %v163
    %189 = vmatprep.subr.mxu0 0.0
    %190 = vmatpush1.msra.mxu0 %v164
    %191 = vmatprep.subr.mxu0 0.0
    %192 = vmatpush1.msra.mxu0 %v165
    %193 = vmatprep.subr.mxu0 0.0
    %194 = vmatpush1.msra.mxu0 %v166
    %195 = vmatprep.subr.mxu0 0.0
    %196 = vmatpush1.msra.mxu0 %v167
    %197 = vmatprep.subr.mxu0 0.0
    %198 = vmatpush1.msra.mxu0 %v168
    %199 = vmatprep.subr.mxu0 0.0
    %200 = vmatpush1.msra.mxu0 %v169
    %201 = vmatprep.subr.mxu0 0.0
    %202 = vmatpush1.msra.mxu0 %v170
    %203 = vmatprep.subr.mxu0 0.0
    %204 = vmatpush1.msra.mxu0 %v171
    %205 = vmatprep.subr.mxu0 0.0
    %206 = vmatpush1.msra.mxu0 %v172
    %207 = vmatprep.subr.mxu0 0.0
    %208 = vmatpush1.msra.mxu0 %v173
    %209 = vmatprep.subr.mxu0 0.0
    %210 = vmatpush1.msra.mxu0 %v174
    %211 = vmatprep.subr.mxu0 0.0
    %212 = vmatpush1.msra.mxu0 %v175
    %213 = vmatprep.subr.mxu0 0.0
    %214 = vmatpush1.msra.mxu0 %v176
    %215 = vmatprep.subr.mxu0 0.0
    %216 = vmatpush1.msra.mxu0 %v177
    %217 = vmatprep.subr.mxu0 0.0
    %218 = vmatpush1.msra.mxu0 0.0
    %219 = vmatprep.subr.mxu0 0.0
    %220 = vmatpush1.msra.mxu0 0.0
    %221 = vmatprep.subr.mxu0 0.0
    %222 = vmatpush1.msra.mxu0 0.0
    %223 = vmatprep.subr.mxu0 0.0
    %224 = vmatpush1.msra.mxu0 0.0
    %225 = vmatprep.subr.mxu0 0.0
    %226 = vmatpush1.msra.mxu0 0.0
    %227 = vmatprep.subr.mxu0 0.0
    %228 = vmatpush1.msra.mxu0 0.0
    %229 = vmatprep.subr.mxu0 0.0
    %230 = vmatpush1.msra.mxu0 0.0
    %231 = vmatprep.subr.mxu0 0.0
    %232 = vmatpush1.msra.mxu0 0.0
    %233 = vmatprep.subr.mxu0 0.0
    %234 = vmatpush1.msra.mxu0 0.0
    %235 = vmatprep.subr.mxu0 0.0
    %236 = vmatpush1.msra.mxu0 0.0
    %237 = vmatprep.subr.mxu0 0.0
    %238 = vmatpush1.msra.mxu0 0.0
    %239 = vmatprep.subr.mxu0 0.0
    %240 = vmatpush1.msra.mxu0 0.0
    %241 = vmatprep.subr.mxu0 0.0
    %242 = vmatpush1.msra.mxu0 0.0
    %243 = vmatprep.subr.mxu0 0.0
    %244 = vmatpush1.msra.mxu0 0.0
    %245 = vmatprep.subr.mxu0 0.0
    %246 = vmatpush1.msra.mxu0 0.0
    %247 = vmatprep.subr.mxu0 0.0
    %248 = vmatpush1.msra.mxu0 0.0
    %249 = vmatprep.mubr.f32.mxu0 0.0
    %250 = vmatmul.mubr.f32.gmra.mrb[0].mxu0 %v161
    %v251 = vpop.f32.mrb[0].mxu0
    %v252 = vadd.f32 %v183, %v251
    %v253 = vpop.f32.mrb[0].mxu0
    %254 = vdwg.mxu0
    %v255 = vtanh.pop %v252
    %v256 = vld [vmem:[#allocation6] sm:$0xff]
    %v257 = vld [vmem:[#allocation6 + $0x8] sm:$0xff]
    %v258 = vld [vmem:[#allocation6 + $0x10] sm:$0xff]
    %v259 = vld [vmem:[#allocation6 + $0x18] sm:$0xff]
    %v260 = vld [vmem:[#allocation6 + $0x20] sm:$0xff]
    %v261 = vld [vmem:[#allocation6 + $0x28] sm:$0xff]
    %v262 = vld [vmem:[#allocation6 + $0x30] sm:$0xff]
    %v263 = vld [vmem:[#allocation6 + $0x38] sm:$0xff]
    %v264 = vld [vmem:[#allocation6 + $0x40] sm:$0xff]
    %v265 = vld [vmem:[#allocation6 + $0x48] sm:$0xff]
    %v266 = vld [vmem:[#allocation6 + $0x50] sm:$0xff]
    %v267 = vld [vmem:[#allocation6 + $0x58] sm:$0xff]
    %v268 = vld [vmem:[#allocation6 + $0x60] sm:$0xff]
    %v269 = vld [vmem:[#allocation6 + $0x68] sm:$0xff]
    %v270 = vld [vmem:[#allocation6 + $0x70] sm:$0xff]
    %v271 = vld [vmem:[#allocation6 + $0x78] sm:$0xff]
    %v272 = vld [vmem:[%s6] sm:$0x1]
    %v274 = vlaneseq
    %v275 = vshrl.u32 %v274, 7
    %v276 = vsub.s32 0, %v275
    %v277 = vrot.slane %v272, %v276
    %279 = vmatprep.subr.mxu0 0.0
    %280 = vmatpush1.msra.mxu0 %v256
    %281 = vmatprep.subr.mxu0 0.0
    %282 = vmatpush1.msra.mxu0 %v257
    %283 = vmatprep.subr.mxu0 0.0
    %284 = vmatpush1.msra.mxu0 %v258
    %285 = vmatprep.subr.mxu0 0.0
    %286 = vmatpush1.msra.mxu0 %v259
    %287 = vmatprep.subr.mxu0 0.0
    %288 = vmatpush1.msra.mxu0 %v260
    %289 = vmatprep.subr.mxu0 0.0
    %290 = vmatpush1.msra.mxu0 %v261
    %291 = vmatprep.subr.mxu0 0.0
    %292 = vmatpush1.msra.mxu0 %v262
    %293 = vmatprep.subr.mxu0 0.0
    %294 = vmatpush1.msra.mxu0 %v263
    %295 = vmatprep.subr.mxu0 0.0
    %296 = vmatpush1.msra.mxu0 %v264
    %297 = vmatprep.subr.mxu0 0.0
    %298 = vmatpush1.msra.mxu0 %v265
    %299 = vmatprep.subr.mxu0 0.0
    %300 = vmatpush1.msra.mxu0 %v266
    %301 = vmatprep.subr.mxu0 0.0
    %302 = vmatpush1.msra.mxu0 %v267
    %303 = vmatprep.subr.mxu0 0.0
    %304 = vmatpush1.msra.mxu0 %v268
    %305 = vmatprep.subr.mxu0 0.0
    %306 = vmatpush1.msra.mxu0 %v269
    %307 = vmatprep.subr.mxu0 0.0
    %308 = vmatpush1.msra.mxu0 %v270
    %309 = vmatprep.subr.mxu0 0.0
    %310 = vmatpush1.msra.mxu0 %v271
    %311 = vmatprep.subr.mxu0 0.0
    %312 = vmatpush1.msra.mxu0 0.0
    %313 = vmatprep.subr.mxu0 0.0
    %314 = vmatpush1.msra.mxu0 0.0
    %315 = vmatprep.subr.mxu0 0.0
    %316 = vmatpush1.msra.mxu0 0.0
    %317 = vmatprep.subr.mxu0 0.0
    %318 = vmatpush1.msra.mxu0 0.0
    %319 = vmatprep.subr.mxu0 0.0
    %320 = vmatpush1.msra.mxu0 0.0
    %321 = vmatprep.subr.mxu0 0.0
    %322 = vmatpush1.msra.mxu0 0.0
    %323 = vmatprep.subr.mxu0 0.0
    %324 = vmatpush1.msra.mxu0 0.0
    %325 = vmatprep.subr.mxu0 0.0
    %326 = vmatpush1.msra.mxu0 0.0
    %327 = vmatprep.subr.mxu0 0.0
    %328 = vmatpush1.msra.mxu0 0.0
    %329 = vmatprep.subr.mxu0 0.0
    %330 = vmatpush1.msra.mxu0 0.0
    %331 = vmatprep.subr.mxu0 0.0
    %332 = vmatpush1.msra.mxu0 0.0
    %333 = vmatprep.subr.mxu0 0.0
    %334 = vmatpush1.msra.mxu0 0.0
    %335 = vmatprep.subr.mxu0 0.0
    %336 = vmatpush1.msra.mxu0 0.0
    %337 = vmatprep.subr.mxu0 0.0
    %338 = vmatpush1.msra.mxu0 0.0
    %339 = vmatprep.subr.mxu0 0.0
    %340 = vmatpush1.msra.mxu0 0.0
    %341 = vmatprep.subr.mxu0 0.0
    %342 = vmatpush1.msra.mxu0 0.0
    %343 = vmatprep.mubr.f32.mxu0 0.0
    %344 = vmatmul.mubr.f32.gmra.mrb[0].mxu0 %v255
    %v345 = vpop.f32.mrb[0].mxu0
    %v346 = vadd.f32 %v277, %v345
    %v347 = vpop.f32.mrb[0].mxu0
    %348 = vdwg.mxu0
    %v349 = vlaneseq
    %v350 = vand.u32 %v349, 127
    %vm351 = vcmp.lt.s32.totalorder %v350, 10
    %v352 = vsel %vm351, %v346, -1e+30
    %353 = vmax.xlane.f32.xlu0 %v352
    %v354 = vpop.xlane.xlu0 %353
    %v355 = vsub.f32 %v352, %v354
    %v356 = vmul.f32 %v355, 1.442695
    %v357 = vpow.pop %v356
    %358 = vadd.xlane.f32.xlu0 %v357
    %v359 = vpop.xlane.xlu0 %358
    %v360 = vrcp.pop %v359
    %v361 = vmul.f32 %v357, %v360
    %362 = vst [vmem:[%s7] sm:$0xff] %v361
    // Predicated region
    $region42: #{linear_net_forward.1} parent=1 // pred_check
      _
    $region43: #{linear_net_forward.1} parent=1 // pred_check_branch
      %364 = sbr.rel (0) target = $region45
    $region44: #{linear_net_forward.1} parent=1 // pred_region
      _
    $region45: #{linear_net_forward.1} parent=1 // pred_fallthru
      _
    // Predicated region
    $region46: #{linear_net_forward.1} parent=1 // pred_check
      _
    $region47: #{linear_net_forward.1} parent=1 // pred_check_branch
      %366 = sbr.rel (0) target = $region49
    $region48: #{linear_net_forward.1} parent=1 // pred_region
      _
    $region49: #{linear_net_forward.1} parent=1 // pred_fallthru
      _
    %367 = vsyncpa [#allocation3], 1
    %368 = vsyncpa [#allocation5], 1

</llo_original>
